<compile_context>
chip_gen: v5e
topology: v5e:2x2
jax: 0.10.0
libtpu: 0.0.40
codegen_flags: <defaults>
</compile_context>

<pallas_src>
import jax
import jax.numpy as jnp
from jax.experimental import pallas as pl
from jax.experimental.pallas import tpu as pltpu

# ----------------------------- sizes ---------------------------------------
B = 2       # batch
T = 8       # frames (tokens per batch element)
D = 32      # per-frame feature dim (njoints*nfeats analogue)
H = 128     # hidden / embedding dim (lane-aligned)
C = 16      # condition vector dim
N = B * T   # total tokens


# ----------------------------- Pallas kernel -------------------------------
def _fused_denoiser_kernel(uncond_ref,                     # SMEM scalar prefetch
                           x_ref, sin_ref, cond_ref,
                           wt_ref, bt_ref, wc_ref, bc_ref,
                           w1_ref, b1_ref, w2_ref, b2_ref,
                           o_ref):
    """Whole denoiser forward in one kernel.

    emb   = tanh(sin @ Wt + bt) + (cond @ Wc + bc) * (uncond ? 0 : 1)   [B,H]
    out   = gelu(x @ W1 + b1 + emb[batch(token)]) @ W2 + b2             [N,D]
    """
    n = x_ref.shape[0]
    nb, h = sin_ref.shape
    t = n // nb

    # --- embedding glue (previously 4-5 separate XLA dispatches) ---
    t_emb = jnp.tanh(
        jnp.dot(sin_ref[...], wt_ref[...], preferred_element_type=jnp.float32)
        + bt_ref[...])                                              # [B,H] f32
    cond_emb = (jnp.dot(cond_ref[...], wc_ref[...],
                        preferred_element_type=jnp.float32)
                + bc_ref[...])                                      # [B,H] f32
    keep = jnp.where(uncond_ref[0] != 0, 0.0, 1.0)                  # SMEM scalar
    emb = t_emb + cond_emb * keep                                   # [B,H] f32

    # --- fused token MLP (bf16 MXU operands, f32 accumulation) ---
    hid = jnp.dot(x_ref[...].astype(jnp.bfloat16), w1_ref[...],
                  preferred_element_type=jnp.float32) + b1_ref[...]  # [N,H] f32
    # per-batch embedding injected via a free tile-aligned [N,H]->[B,T,H] view
    # (no Python-loop broadcast/concat, no HBM-materialized repeat)
    hid = hid.reshape(nb, t, h) + emb[:, None, :]
    hid = jax.nn.gelu(hid).reshape(n, h)                             # f32 VPU/EUP
    out = jnp.dot(hid.astype(jnp.bfloat16), w2_ref[...],
                  preferred_element_type=jnp.float32) + b2_ref[...]  # [N,D] f32
    o_ref[...] = out.astype(o_ref.dtype)


def fused_denoiser(uncond_flag, x_tok, sin_emb, cond,
                   w_time, b_time, w_cond, b_cond, w1, b1, w2, b2):
    """x_tok: [N, D] f32, sin_emb: [B, H] f32, cond: [B, C] f32 -> [N, D] f32."""
    n, d_in = x_tok.shape
    nb, h = sin_emb.shape
    c = cond.shape[1]
    d_out = w2.shape[1]
    full = lambda i, u: (0, 0)   # single block; u = SMEM uncond ref (unused here)
    return pl.pallas_call(
        _fused_denoiser_kernel,
        out_shape=jax.ShapeDtypeStruct((n, d_out), jnp.float32),
        grid_spec=pltpu.PrefetchScalarGridSpec(
            num_scalar_prefetch=1,          # uncond flag lives in SMEM
            grid=(1,),                      # whole problem = one block / one step
            in_specs=[
                pl.BlockSpec((n, d_in), full),     # x tokens
                pl.BlockSpec((nb, h), full),       # sinusoid timestep emb
                pl.BlockSpec((nb, c), full),       # condition vectors
                pl.BlockSpec((h, h), full),        # w_time
                pl.BlockSpec((1, h), full),        # b_time
                pl.BlockSpec((c, h), full),        # w_cond
                pl.BlockSpec((1, h), full),        # b_cond
                pl.BlockSpec((d_in, h), full),     # W1 (bf16, cached)
                pl.BlockSpec((1, h), full),        # b1
                pl.BlockSpec((h, d_out), full),    # W2 (bf16, cached)
                pl.BlockSpec((1, d_out), full),    # b2
            ],
            out_specs=pl.BlockSpec((n, d_out), full),
        ),
        compiler_params=pltpu.CompilerParams(
            dimension_semantics=("arbitrary",)),
    )(uncond_flag, x_tok, sin_emb, cond,
      w_time, b_time, w_cond, b_cond, w1, b1, w2, b2)


# ----------------------------- synthetic inner model -----------------------
def timestep_embedding(timesteps, dim, max_period=10000.0):
    half = dim // 2
    freqs = jnp.exp(-jnp.log(max_period) *
                    jnp.arange(half, dtype=jnp.float32) / half)
    args = timesteps.astype(jnp.float32)[:, None] * freqs[None, :]
    return jnp.concatenate([jnp.cos(args), jnp.sin(args)], axis=-1)   # [B, dim]


def make_params(key):
    ks = jax.random.split(key, 8)
    s = lambda k, shape, fan: (jax.random.normal(k, shape, jnp.float32)
                               / jnp.sqrt(jnp.float32(fan)))
    w1 = s(ks[2], (D, H), D)
    w2 = s(ks[3], (H, D), H)
    return dict(
        cond_mask_prob=0.1,                       # must be > 0 (wrapper assert)
        w_time=s(ks[0], (H, H), H),
        b_time=0.1 * jax.random.normal(ks[6], (1, H), jnp.float32),
        w_cond=s(ks[1], (C, H), C),
        b_cond=0.1 * jax.random.normal(ks[7], (1, H), jnp.float32),
        w1=w1, b1=0.1 * jax.random.normal(ks[4], (1, H), jnp.float32),
        w2=w2, b2=0.1 * jax.random.normal(ks[5], (1, D), jnp.float32),
        # bf16 MXU copies cached once (no per-call convert dispatches)
        w1_bf16=w1.astype(jnp.bfloat16),
        w2_bf16=w2.astype(jnp.bfloat16),
    )


@jax.jit
def _denoiser_apply(params, x, timesteps, cond, uncond_flag):
    b, t, d = x.shape
    sin = timestep_embedding(timesteps, H)         # tiny glue, fused under jit
    x_tok = x.reshape(b * t, d)                    # free row-major bitcast
    out = fused_denoiser(
        uncond_flag, x_tok, sin, cond,
        params['w_time'], params['b_time'], params['w_cond'], params['b_cond'],
        params['w1_bf16'], params['b1'], params['w2_bf16'], params['b2'])
    return out.reshape(b, t, d)                    # free row-major bitcast


def inner_model_forward(params, x, timesteps, y):
    """Synthetic denoiser.  x: [B, T, D] token-major, timesteps: [B] int32,
    y: dict with 'cond': [B, C] and optional 'uncond': bool."""
    uncond_flag = jnp.asarray([1 if y.get('uncond', False) else 0], jnp.int32)
    return _denoiser_apply(params, x, timesteps, y['cond'], uncond_flag)


def inner_model_forward_ref(params, x, timesteps, y):
    """Pure-JAX reference of the same forward (for correctness check)."""
    b, t, d = x.shape
    sin = timestep_embedding(timesteps, H)
    t_emb = jnp.tanh(sin @ params['w_time'] + params['b_time'])
    cond_emb = y['cond'] @ params['w_cond'] + params['b_cond']
    if y.get('uncond', False):
        cond_emb = cond_emb * 0.0
    emb = t_emb + cond_emb
    x_tok = x.reshape(b * t, d).astype(jnp.bfloat16)
    emb_tok = jnp.repeat(emb, t, axis=0)
    h = (jnp.dot(x_tok, params['w1_bf16'], preferred_element_type=jnp.float32)
         + params['b1'] + emb_tok)
    h = jax.nn.gelu(h)
    out = (jnp.dot(h.astype(jnp.bfloat16), params['w2_bf16'],
                   preferred_element_type=jnp.float32) + params['b2'])
    return out.reshape(b, t, d)


# ----------------------------- UnconditionedModel wrapper ------------------
class UnconditionedModel:
    """Forces unconditional sampling of the wrapped model."""

    def __init__(self, model_forward, params):
        assert params['cond_mask_prob'] > 0, (
            'Cannot run unconditional generation on a model that has not been '
            'trained with no conditions')
        self._model_forward = model_forward
        self._params = params

    def __getattr__(self, name):
        # attribute passthrough to the wrapped model's params
        params = object.__getattribute__(self, '_params')
        if name in params:
            return params[name]
        raise AttributeError(name)

    def forward(self, x, timesteps, y=None):
        y_uncond = dict(y)          # deepcopy-of-dict equivalent for our y
        y_uncond['uncond'] = True
        return self._model_forward(self._params, x, timesteps, y_uncond)


# ----------------------------- main -----------------------------------------
if __name__ == "__main__":
    key = jax.random.PRNGKey(0)
    k_p, k_x, k_c, k_t = jax.random.split(key, 4)

    params = make_params(k_p)
    x = jax.random.normal(k_x, (B, T, D), jnp.float32)          # [B, T, D]
    timesteps = jax.random.randint(k_t, (B,), 0, 1000, jnp.int32)
    y = {'cond': jax.random.normal(k_c, (B, C), jnp.float32)}

    model = UnconditionedModel(inner_model_forward, params)
    out = jax.block_until_ready(model.forward(x, timesteps, y=y))
    assert out.shape == (B, T, D)
    assert model.cond_mask_prob > 0            # attribute passthrough works

    # correctness vs pure-JAX reference (with uncond=True as the wrapper forces)
    ref = inner_model_forward_ref(params, x, timesteps,
                                  {'cond': y['cond'], 'uncond': True})
    assert jnp.allclose(out, ref, atol=1e-2, rtol=1e-2)

    # unconditional semantics: output must not depend on y['cond']
    out2 = jax.block_until_ready(
        model.forward(x, timesteps, y={'cond': y['cond'] + 123.0}))
    assert jnp.allclose(out, out2, atol=1e-6)

    # conditional path (uncond flag = 0 in SMEM) still works and differs
    out_cond = jax.block_until_ready(
        inner_model_forward(params, x, timesteps, {'cond': y['cond']}))
    ref_cond = inner_model_forward_ref(params, x, timesteps, {'cond': y['cond']})
    assert jnp.allclose(out_cond, ref_cond, atol=1e-2, rtol=1e-2)
    assert not bool(jnp.allclose(out, out_cond, atol=1e-4))

    print("KERNEL_OK")
</pallas_src>

<mosaic_0001>
module attributes {stable_mosaic.version = 11 : i64} {
  func.func @_fused_denoiser_kernel(%arg0: i32, %arg1: memref<1xi32, #tpu.memory_space<smem>>, %arg2: memref<16x32xf32, #tpu.memory_space<vmem>>, %arg3: memref<2x128xf32, #tpu.memory_space<vmem>>, %arg4: memref<2x16xf32, #tpu.memory_space<vmem>>, %arg5: memref<128x128xf32, #tpu.memory_space<vmem>>, %arg6: memref<1x128xf32, #tpu.memory_space<vmem>>, %arg7: memref<16x128xf32, #tpu.memory_space<vmem>>, %arg8: memref<1x128xf32, #tpu.memory_space<vmem>>, %arg9: memref<32x128xbf16, #tpu.memory_space<vmem>>, %arg10: memref<1x128xf32, #tpu.memory_space<vmem>>, %arg11: memref<128x32xbf16, #tpu.memory_space<vmem>>, %arg12: memref<1x32xf32, #tpu.memory_space<vmem>>, %arg13: memref<16x32xf32, #tpu.memory_space<vmem>>) attributes {dimension_semantics = [#tpu.dimension_semantics<arbitrary>], iteration_bounds = array<i64: 1>, scalar_prefetch = 1 : i64, scratch_operands = 0 : i64, tpu.core_type = #tpu.core_type<tc>, window_params = [{pipeline_mode = #tpu.pipeline_mode<synchronous>, transform_indices = @transform_0, window_bounds = array<i64: 16, 32>}, {pipeline_mode = #tpu.pipeline_mode<synchronous>, transform_indices = @transform_1, window_bounds = array<i64: 2, 128>}, {pipeline_mode = #tpu.pipeline_mode<synchronous>, transform_indices = @transform_2, window_bounds = array<i64: 2, 16>}, {pipeline_mode = #tpu.pipeline_mode<synchronous>, transform_indices = @transform_3, window_bounds = array<i64: 128, 128>}, {pipeline_mode = #tpu.pipeline_mode<synchronous>, transform_indices = @transform_4, window_bounds = array<i64: 1, 128>}, {pipeline_mode = #tpu.pipeline_mode<synchronous>, transform_indices = @transform_5, window_bounds = array<i64: 16, 128>}, {pipeline_mode = #tpu.pipeline_mode<synchronous>, transform_indices = @transform_6, window_bounds = array<i64: 1, 128>}, {pipeline_mode = #tpu.pipeline_mode<synchronous>, transform_indices = @transform_7, window_bounds = array<i64: 32, 128>}, {pipeline_mode = #tpu.pipeline_mode<synchronous>, transform_indices = @transform_8, window_bounds = array<i64: 1, 128>}, {pipeline_mode = #tpu.pipeline_mode<synchronous>, transform_indices = @transform_9, window_bounds = array<i64: 128, 32>}, {pipeline_mode = #tpu.pipeline_mode<synchronous>, transform_indices = @transform_10, window_bounds = array<i64: 1, 32>}, {pipeline_mode = #tpu.pipeline_mode<synchronous>, transform_indices = @transform_11, window_bounds = array<i64: 16, 32>}]} {
    %c0 = arith.constant 0 : index
    %c0_0 = arith.constant 0 : index
    %0 = vector.load %arg3[%c0, %c0_0] : memref<2x128xf32, #tpu.memory_space<vmem>>, vector<2x128xf32>
    %c0_1 = arith.constant 0 : index
    %c0_2 = arith.constant 0 : index
    %1 = vector.load %arg5[%c0_1, %c0_2] : memref<128x128xf32, #tpu.memory_space<vmem>>, vector<128x128xf32>
    %cst = arith.constant dense<0.000000e+00> : vector<2x128xf32>
    %2 = tpu.matmul %0, %1, %cst {dimension_numbers = #tpu.dot_dimension_numbers<[1], [0], [0], [1], [0, 0, 1, 1], [], []>} : vector<2x128xf32>, vector<128x128xf32>, vector<2x128xf32> -> vector<2x128xf32>
    %c0_3 = arith.constant 0 : index
    %c0_4 = arith.constant 0 : index
    %3 = vector.load %arg6[%c0_3, %c0_4] : memref<1x128xf32, #tpu.memory_space<vmem>>, vector<1x128xf32>
    %4 = vector.broadcast %3 : vector<1x128xf32> to vector<2x128xf32>
    %5 = arith.addf %2, %4 : vector<2x128xf32>
    %6 = math.tanh %5 : vector<2x128xf32>
    %c0_5 = arith.constant 0 : index
    %c0_6 = arith.constant 0 : index
    %7 = vector.load %arg4[%c0_5, %c0_6] : memref<2x16xf32, #tpu.memory_space<vmem>>, vector<2x16xf32>
    %c0_7 = arith.constant 0 : index
    %c0_8 = arith.constant 0 : index
    %8 = vector.load %arg7[%c0_7, %c0_8] : memref<16x128xf32, #tpu.memory_space<vmem>>, vector<16x128xf32>
    %cst_9 = arith.constant dense<0.000000e+00> : vector<2x128xf32>
    %9 = tpu.matmul %7, %8, %cst_9 {dimension_numbers = #tpu.dot_dimension_numbers<[1], [0], [0], [1], [0, 0, 1, 1], [], []>} : vector<2x16xf32>, vector<16x128xf32>, vector<2x128xf32> -> vector<2x128xf32>
    %c0_10 = arith.constant 0 : index
    %c0_11 = arith.constant 0 : index
    %10 = vector.load %arg8[%c0_10, %c0_11] : memref<1x128xf32, #tpu.memory_space<vmem>>, vector<1x128xf32>
    %11 = vector.broadcast %10 : vector<1x128xf32> to vector<2x128xf32>
    %12 = arith.addf %9, %11 : vector<2x128xf32>
    %c0_12 = arith.constant 0 : index
    %13 = memref.load %arg1[%c0_12] : memref<1xi32, #tpu.memory_space<smem>>
    %c0_i32 = arith.constant 0 : i32
    %14 = arith.cmpi ne, %13, %c0_i32 : i32
    %cst_13 = arith.constant 0.000000e+00 : f32
    %cst_14 = arith.constant 1.000000e+00 : f32
    %15 = arith.select %14, %cst_13, %cst_14 : f32
    %16 = vector.broadcast %15 : f32 to vector<2x128xf32>
    %17 = arith.mulf %12, %16 : vector<2x128xf32>
    %18 = arith.addf %6, %17 : vector<2x128xf32>
    %c0_15 = arith.constant 0 : index
    %c0_16 = arith.constant 0 : index
    %19 = vector.load %arg2[%c0_15, %c0_16] : memref<16x32xf32, #tpu.memory_space<vmem>>, vector<16x32xf32>
    %20 = arith.truncf %19 : vector<16x32xf32> to vector<16x32xbf16>
    %c0_17 = arith.constant 0 : index
    %c0_18 = arith.constant 0 : index
    %21 = vector.load %arg9[%c0_17, %c0_18] : memref<32x128xbf16, #tpu.memory_space<vmem>>, vector<32x128xbf16>
    %cst_19 = arith.constant dense<0.000000e+00> : vector<16x128xf32>
    %22 = tpu.matmul %20, %21, %cst_19 {dimension_numbers = #tpu.dot_dimension_numbers<[1], [0], [0], [1], [0, 0, 1, 1], [], []>} : vector<16x32xbf16>, vector<32x128xbf16>, vector<16x128xf32> -> vector<16x128xf32>
    %c0_20 = arith.constant 0 : index
    %c0_21 = arith.constant 0 : index
    %23 = vector.load %arg10[%c0_20, %c0_21] : memref<1x128xf32, #tpu.memory_space<vmem>>, vector<1x128xf32>
    %24 = vector.broadcast %23 : vector<1x128xf32> to vector<16x128xf32>
    %25 = arith.addf %22, %24 : vector<16x128xf32>
    %26 = vector.shape_cast %25 : vector<16x128xf32> to vector<2x8x128xf32>
    %27 = vector.shape_cast %18 : vector<2x128xf32> to vector<2x1x128xf32>
    %28 = vector.broadcast %27 : vector<2x1x128xf32> to vector<2x8x128xf32>
    %29 = arith.addf %26, %28 : vector<2x8x128xf32>
    %30 = arith.mulf %29, %29 : vector<2x8x128xf32>
    %31 = arith.mulf %29, %30 : vector<2x8x128xf32>
    %cst_22 = arith.constant 4.471500e-02 : f32
    %32 = vector.broadcast %cst_22 : f32 to vector<2x8x128xf32>
    %33 = arith.mulf %32, %31 : vector<2x8x128xf32>
    %34 = arith.addf %29, %33 : vector<2x8x128xf32>
    %cst_23 = arith.constant 0.797884583 : f32
    %35 = vector.broadcast %cst_23 : f32 to vector<2x8x128xf32>
    %36 = arith.mulf %35, %34 : vector<2x8x128xf32>
    %37 = math.tanh %36 : vector<2x8x128xf32>
    %cst_24 = arith.constant 1.000000e+00 : f32
    %38 = vector.broadcast %cst_24 : f32 to vector<2x8x128xf32>
    %39 = arith.addf %38, %37 : vector<2x8x128xf32>
    %cst_25 = arith.constant 5.000000e-01 : f32
    %40 = vector.broadcast %cst_25 : f32 to vector<2x8x128xf32>
    %41 = arith.mulf %40, %39 : vector<2x8x128xf32>
    %42 = arith.mulf %29, %41 : vector<2x8x128xf32>
    %43 = vector.shape_cast %42 : vector<2x8x128xf32> to vector<16x128xf32>
    %44 = arith.truncf %43 : vector<16x128xf32> to vector<16x128xbf16>
    %c0_26 = arith.constant 0 : index
    %c0_27 = arith.constant 0 : index
    %45 = vector.load %arg11[%c0_26, %c0_27] : memref<128x32xbf16, #tpu.memory_space<vmem>>, vector<128x32xbf16>
    %cst_28 = arith.constant dense<0.000000e+00> : vector<16x32xf32>
    %46 = tpu.matmul %44, %45, %cst_28 {dimension_numbers = #tpu.dot_dimension_numbers<[1], [0], [0], [1], [0, 0, 1, 1], [], []>} : vector<16x128xbf16>, vector<128x32xbf16>, vector<16x32xf32> -> vector<16x32xf32>
    %c0_29 = arith.constant 0 : index
    %c0_30 = arith.constant 0 : index
    %47 = vector.load %arg12[%c0_29, %c0_30] : memref<1x32xf32, #tpu.memory_space<vmem>>, vector<1x32xf32>
    %48 = vector.broadcast %47 : vector<1x32xf32> to vector<16x32xf32>
    %49 = arith.addf %46, %48 : vector<16x32xf32>
    %c0_31 = arith.constant 0 : index
    %c0_32 = arith.constant 0 : index
    %50 = vector.load %arg13[%c0_31, %c0_32] : memref<16x32xf32, #tpu.memory_space<vmem>>, vector<16x32xf32>
    tpu.vector_store %arg13[%c0_31, %c0_32], %49 {strides = array<i32>} : memref<16x32xf32, #tpu.memory_space<vmem>>, vector<16x32xf32>,
    return
  }
  func.func @transform_0(%arg0: i32, %arg1: memref<1xi32, #tpu.memory_space<smem>>) -> (i32, i32) {
    %c0_i32 = arith.constant 0 : i32
    %c0_i32_0 = arith.constant 0 : i32
    %c0_i32_1 = arith.constant 0 : i32
    return %c0_i32, %c0_i32_0 : i32, i32
  }
  func.func @transform_1(%arg0: i32, %arg1: memref<1xi32, #tpu.memory_space<smem>>) -> (i32, i32) {
    %c0_i32 = arith.constant 0 : i32
    %c0_i32_0 = arith.constant 0 : i32
    %c0_i32_1 = arith.constant 0 : i32
    return %c0_i32, %c0_i32_0 : i32, i32
  }
  func.func @transform_2(%arg0: i32, %arg1: memref<1xi32, #tpu.memory_space<smem>>) -> (i32, i32) {
    %c0_i32 = arith.constant 0 : i32
    %c0_i32_0 = arith.constant 0 : i32
    %c0_i32_1 = arith.constant 0 : i32
    return %c0_i32, %c0_i32_0 : i32, i32
  }
  func.func @transform_3(%arg0: i32, %arg1: memref<1xi32, #tpu.memory_space<smem>>) -> (i32, i32) {
    %c0_i32 = arith.constant 0 : i32
    %c0_i32_0 = arith.constant 0 : i32
    %c0_i32_1 = arith.constant 0 : i32
    return %c0_i32, %c0_i32_0 : i32, i32
  }
  func.func @transform_4(%arg0: i32, %arg1: memref<1xi32, #tpu.memory_space<smem>>) -> (i32, i32) {
    %c0_i32 = arith.constant 0 : i32
    %c0_i32_0 = arith.constant 0 : i32
    %c0_i32_1 = arith.constant 0 : i32
    return %c0_i32, %c0_i32_0 : i32, i32
  }
  func.func @transform_5(%arg0: i32, %arg1: memref<1xi32, #tpu.memory_space<smem>>) -> (i32, i32) {
    %c0_i32 = arith.constant 0 : i32
    %c0_i32_0 = arith.constant 0 : i32
    %c0_i32_1 = arith.constant 0 : i32
    return %c0_i32, %c0_i32_0 : i32, i32
  }
  func.func @transform_6(%arg0: i32, %arg1: memref<1xi32, #tpu.memory_space<smem>>) -> (i32, i32) {
    %c0_i32 = arith.constant 0 : i32
    %c0_i32_0 = arith.constant 0 : i32
    %c0_i32_1 = arith.constant 0 : i32
    return %c0_i32, %c0_i32_0 : i32, i32
  }
  func.func @transform_7(%arg0: i32, %arg1: memref<1xi32, #tpu.memory_space<smem>>) -> (i32, i32) {
    %c0_i32 = arith.constant 0 : i32
    %c0_i32_0 = arith.constant 0 : i32
    %c0_i32_1 = arith.constant 0 : i32
    return %c0_i32, %c0_i32_0 : i32, i32
  }
  func.func @transform_8(%arg0: i32, %arg1: memref<1xi32, #tpu.memory_space<smem>>) -> (i32, i32) {
    %c0_i32 = arith.constant 0 : i32
    %c0_i32_0 = arith.constant 0 : i32
    %c0_i32_1 = arith.constant 0 : i32
    return %c0_i32, %c0_i32_0 : i32, i32
  }
  func.func @transform_9(%arg0: i32, %arg1: memref<1xi32, #tpu.memory_space<smem>>) -> (i32, i32) {
    %c0_i32 = arith.constant 0 : i32
    %c0_i32_0 = arith.constant 0 : i32
    %c0_i32_1 = arith.constant 0 : i32
    return %c0_i32, %c0_i32_0 : i32, i32
  }
  func.func @transform_10(%arg0: i32, %arg1: memref<1xi32, #tpu.memory_space<smem>>) -> (i32, i32) {
    %c0_i32 = arith.constant 0 : i32
    %c0_i32_0 = arith.constant 0 : i32
    %c0_i32_1 = arith.constant 0 : i32
    return %c0_i32, %c0_i32_0 : i32, i32
  }
  func.func @transform_11(%arg0: i32, %arg1: memref<1xi32, #tpu.memory_space<smem>>) -> (i32, i32) {
    %c0_i32 = arith.constant 0 : i32
    %c0_i32_0 = arith.constant 0 : i32
    %c0_i32_1 = arith.constant 0 : i32
    return %c0_i32, %c0_i32_0 : i32, i32
  }
}

</mosaic_0001>

<llo_original>
// kernel: _denoiser_apply.1
$region0: #{_denoiser_apply.1}
  #allocation0 [shape = 'u32[]', space=smem, size = 0x4, offset = 0x4, fixed_abs, tag = 'smem constant byte address 0x4 - core index']
  #allocation1 [shape = 'u32[72,128]{1,0:T(1,128)}', space=vmem, size = 0x9000, scoped, tag = 'internal scratch']
  #allocation2 [shape = 's32[1]{0}', space=sflag, size = 0x4, scoped, tag = 'scoped memory for _denoiser_apply.1']
  #allocation3 [shape = 's32[1]{0:T(128)S(6)}', space=smem, size = 0x200, scoped, tag = 'prefetched SMEM operand 0']
  %s0 = inlined_call_operand.<no memory space> [shape: s32[1], index: 0, kind: input, shape index: {}]
  %s1 = inlined_call_operand.vmem [shape: f32[16,32], index: 1, kind: input, shape index: {}]
  %s2 = inlined_call_operand.vmem [shape: f32[2,128], index: 2, kind: input, shape index: {}]
  %s3 = inlined_call_operand.vmem [shape: f32[2,16], index: 3, kind: input, shape index: {}]
  %s4 = inlined_call_operand.hbm [shape: f32[128,128], index: 4, kind: input, shape index: {}]
  %s5 = inlined_call_operand.vmem [shape: f32[1,128], index: 5, kind: input, shape index: {}]
  %s6 = inlined_call_operand.vmem [shape: f32[16,128], index: 6, kind: input, shape index: {}]
  %s7 = inlined_call_operand.vmem [shape: f32[1,128], index: 7, kind: input, shape index: {}]
  %s8 = inlined_call_operand.vmem [shape: bf16[32,128], index: 8, kind: input, shape index: {}]
  %s9 = inlined_call_operand.vmem [shape: f32[1,128], index: 9, kind: input, shape index: {}]
  %s10 = inlined_call_operand.vmem [shape: bf16[128,32], index: 10, kind: input, shape index: {}]
  %s11 = inlined_call_operand.vmem [shape: f32[1,32], index: 11, kind: input, shape index: {}]
  %s12 = inlined_call_operand.hbm [shape: f32[16,32], index: 12, kind: output, shape index: {}]
  %s13 = sld [smem:[#allocation0]]
  $region58: #{_denoiser_apply.1} parent=0
    _
  %s15 = ssub.s32 1, %s13
  %s16 = scalar_select 0, %s15, %s13
  %17 = sst [smem:[#allocation3]] %s0
  $region1: #{_denoiser_apply.1} parent=0
    #allocation4 [shape = 'u8[65536]{0}', space=vmem, size = 0x10000, scoped, tag = 'input window, operand 4, single buffered']
    #allocation5 [shape = 's32[1]{0}', space=sflag, size = 0x4, scoped, tag = 'scoped memory for _denoiser_apply.1']
    #allocation6 [shape = 's32[1]{0}', space=sflag, size = 0x4, scoped, tag = 'scoped memory for _denoiser_apply.1']
    #allocation7 [shape = 'u8[8192]{0}', space=vmem, size = 0x2000, scoped, tag = 'output window, operand 0, single buffered']
    %18 = vsyncpa [#allocation5], 0
    %19 = vsyncpa [#allocation6], 0
    // Predicated region
    $region2: #{_denoiser_apply.1} parent=1 // pred_check
      _
    $region3: #{_denoiser_apply.1} parent=1 // pred_check_branch
      %21 = sbr.rel (0) target = $region5
    $region4: #{_denoiser_apply.1} parent=1 // pred_region
      _
    $region5: #{_denoiser_apply.1} parent=1 // pred_fallthru
      _
    // Predicated region
    $region6: #{_denoiser_apply.1} parent=1 // pred_check
      _
    $region7: #{_denoiser_apply.1} parent=1 // pred_check_branch
      %23 = sbr.rel (0) target = $region9
    $region8: #{_denoiser_apply.1} parent=1 // pred_region
      _
    $region9: #{_denoiser_apply.1} parent=1 // pred_fallthru
      _
    // Predicated region
    $region10: #{_denoiser_apply.1} parent=1 // pred_check
      _
    $region11: #{_denoiser_apply.1} parent=1 // pred_check_branch
      %25 = sbr.rel (0) target = $region13
    $region12: #{_denoiser_apply.1} parent=1 // pred_region
      _
    $region13: #{_denoiser_apply.1} parent=1 // pred_fallthru
      _
    // Predicated region
    $region14: #{_denoiser_apply.1} parent=1 // pred_check
      _
    $region15: #{_denoiser_apply.1} parent=1 // pred_check_branch
      %27 = sbr.rel (0) target = $region17
    $region16: #{_denoiser_apply.1} parent=1 // pred_region
      %29 = vsyncadd [#allocation5], 0
      %s30 = sshll.u32 %s4, 4
      %s31 = int_to_ptr.hbm [resolvable:$true] %s30
      %s32 = sshll.u32 [#allocation4], 4
      %s33 = int_to_ptr.vmem [resolvable:$true] %s32
      %38 = dma.hbm_to_vmem [thread:$0]  %s31, 2048, %s33, [#allocation5], 128, 128, 8
    $region17: #{_denoiser_apply.1} parent=1 // pred_fallthru
      _
    // Predicated region
    $region18: #{_denoiser_apply.1} parent=1 // pred_check
      _
    $region19: #{_denoiser_apply.1} parent=1 // pred_check_branch
      %40 = sbr.rel (0) target = $region21
    $region20: #{_denoiser_apply.1} parent=1 // pred_region
      _
    $region21: #{_denoiser_apply.1} parent=1 // pred_fallthru
      _
    // Predicated region
    $region22: #{_denoiser_apply.1} parent=1 // pred_check
      _
    $region23: #{_denoiser_apply.1} parent=1 // pred_check_branch
      %42 = sbr.rel (0) target = $region25
    $region24: #{_denoiser_apply.1} parent=1 // pred_region
      _
    $region25: #{_denoiser_apply.1} parent=1 // pred_fallthru
      _
    // Predicated region
    $region26: #{_denoiser_apply.1} parent=1 // pred_check
      _
    $region27: #{_denoiser_apply.1} parent=1 // pred_check_branch
      %44 = sbr.rel (0) target = $region29
    $region28: #{_denoiser_apply.1} parent=1 // pred_region
      _
    $region29: #{_denoiser_apply.1} parent=1 // pred_fallthru
      _
    // Predicated region
    $region30: #{_denoiser_apply.1} parent=1 // pred_check
      _
    $region31: #{_denoiser_apply.1} parent=1 // pred_check_branch
      %46 = sbr.rel (0) target = $region33
    $region32: #{_denoiser_apply.1} parent=1 // pred_region
      _
    $region33: #{_denoiser_apply.1} parent=1 // pred_fallthru
      _
    // Predicated region
    $region34: #{_denoiser_apply.1} parent=1 // pred_check
      _
    $region35: #{_denoiser_apply.1} parent=1 // pred_check_branch
      %48 = sbr.rel (0) target = $region37
    $region36: #{_denoiser_apply.1} parent=1 // pred_region
      _
    $region37: #{_denoiser_apply.1} parent=1 // pred_fallthru
      _
    // Predicated region
    $region38: #{_denoiser_apply.1} parent=1 // pred_check
      _
    $region39: #{_denoiser_apply.1} parent=1 // pred_check_branch
      %50 = sbr.rel (0) target = $region41
    $region40: #{_denoiser_apply.1} parent=1 // pred_region
      _
    $region41: #{_denoiser_apply.1} parent=1 // pred_fallthru
      _
    // Predicated region
    $region42: #{_denoiser_apply.1} parent=1 // pred_check
      _
    $region43: #{_denoiser_apply.1} parent=1 // pred_check_branch
      %52 = sbr.rel (0) target = $region45
    $region44: #{_denoiser_apply.1} parent=1 // pred_region
      _
    $region45: #{_denoiser_apply.1} parent=1 // pred_fallthru
      _
    // Predicated region
    $region46: #{_denoiser_apply.1} parent=1 // pred_check
      _
    $region47: #{_denoiser_apply.1} parent=1 // pred_check_branch
      %54 = sbr.rel (0) target = $region49
    $region48: #{_denoiser_apply.1} parent=1 // pred_region
      %56 = dma.done [#allocation5], 2048
    $region49: #{_denoiser_apply.1} parent=1 // pred_fallthru
      _
    %v58 = vld [vmem:[%s2] sm:$0x3]
    %v59 = vld [vmem:[#allocation4] sm:$0xff]
    %v60 = vld [vmem:[#allocation4 + $0x8] sm:$0xff]
    %v61 = vld [vmem:[#allocation4 + $0x10] sm:$0xff]
    %v62 = vld [vmem:[#allocation4 + $0x18] sm:$0xff]
    %v63 = vld [vmem:[#allocation4 + $0x20] sm:$0xff]
    %v64 = vld [vmem:[#allocation4 + $0x28] sm:$0xff]
    %v65 = vld [vmem:[#allocation4 + $0x30] sm:$0xff]
    %v66 = vld [vmem:[#allocation4 + $0x38] sm:$0xff]
    %v67 = vld [vmem:[#allocation4 + $0x40] sm:$0xff]
    %v68 = vld [vmem:[#allocation4 + $0x48] sm:$0xff]
    %v69 = vld [vmem:[#allocation4 + $0x50] sm:$0xff]
    %v70 = vld [vmem:[#allocation4 + $0x58] sm:$0xff]
    %v71 = vld [vmem:[#allocation4 + $0x60] sm:$0xff]
    %v72 = vld [vmem:[#allocation4 + $0x68] sm:$0xff]
    %v73 = vld [vmem:[#allocation4 + $0x70] sm:$0xff]
    %v74 = vld [vmem:[#allocation4 + $0x78] sm:$0xff]
    %v75 = vld [vmem:[%s5] sm:$0x1]
    %v77 = vperm.slane %v75, 0
    %79 = vmatpush.msra.mxu0 %v74
    %80 = vmatpush.msra.mxu0 %v73
    %81 = vmatpush.msra.mxu0 %v72
    %82 = vmatpush.msra.mxu0 %v71
    %83 = vmatpush.msra.mxu0 %v70
    %84 = vmatpush.msra.mxu0 %v69
    %85 = vmatpush.msra.mxu0 %v68
    %86 = vmatpush.msra.mxu0 %v67
    %87 = vmatpush.msra.mxu0 %v66
    %88 = vmatpush.msra.mxu0 %v65
    %89 = vmatpush.msra.mxu0 %v64
    %90 = vmatpush.msra.mxu0 %v63
    %91 = vmatpush.msra.mxu0 %v62
    %92 = vmatpush.msra.mxu0 %v61
    %93 = vmatpush.msra.mxu0 %v60
    %94 = vmatpush.msra.mxu0 %v59
    %95 = vmatmul.f32.gmra.mxu0 %v58
    %v96 = vpop.f32.mrf.mxu0
    %v97 = vadd.f32 %v77, %v96
    %98 = vdwg.mxu0
    %v99 = vtanh.pop %v97
    %v100 = vld [vmem:[%s3] sm:$0x3]
    %v101 = vld [vmem:[%s6] sm:$0xff]
    %v102 = vld [vmem:[%s6 + $0x8] sm:$0xff]
    %v103 = vld [vmem:[%s7] sm:$0x1]
    %v105 = vperm.slane %v103, 0
    %vm107 = vcmask 130048
    %v109 = vsel %vm107, %v100, 0
    %111 = vmatpush.msra.mxu0 0.0
    %112 = vmatpush.msra.mxu0 0.0
    %113 = vmatpush.msra.mxu0 0.0
    %114 = vmatpush.msra.mxu0 0.0
    %115 = vmatpush.msra.mxu0 0.0
    %116 = vmatpush.msra.mxu0 0.0
    %117 = vmatpush.msra.mxu0 0.0
    %118 = vmatpush.msra.mxu0 0.0
    %119 = vmatpush.msra.mxu0 0.0
    %120 = vmatpush.msra.mxu0 0.0
    %121 = vmatpush.msra.mxu0 0.0
    %122 = vmatpush.msra.mxu0 0.0
    %123 = vmatpush.msra.mxu0 0.0
    %124 = vmatpush.msra.mxu0 0.0
    %125 = vmatpush.msra.mxu0 %v102
    %126 = vmatpush.msra.mxu0 %v101
    %127 = vmatmul.f32.gmra.mxu0 %v109
    %v128 = vpop.f32.mrf.mxu0
    %v129 = vadd.f32 %v105, %v128
    %130 = vdwg.mxu0
    %s131 = sld [smem:[#allocation3]]
    %p132 = scmp.ne.s32.totalorder %s131, 0
    %s133 = scalar_select %p132, 0.0, 1.0
    %v134 = vstv %s133
    %v135 = vmul.f32 %v129, %v134
    %v136 = vadd.f32 %v99, %v135
    %v137 = vld [vmem:[%s1] sm:$0xff]
    %v138 = vld [vmem:[%s1 + $0x8] sm:$0xff]
    %v139 = vpack.c.bf16 %v138, %v137
    %v140 = vld [vmem:[%s8] sm:$0xf]
    %v141 = vld [vmem:[%s8 + $0x4] sm:$0xf]
    %v142 = vld [vmem:[%s8 + $0x8] sm:$0xf]
    %v143 = vld [vmem:[%s8 + $0xc] sm:$0xf]
    %v144 = vld [vmem:[%s9] sm:$0x1]
    %v146 = vperm.slane %v144, 0
    %v152 = vunpack.c.l.b16 %v140
    %v153 = vunpack.c.l.b16 %v141
    %v154 = vunpack.c.l.b16 %v142
    %v155 = vunpack.c.l.b16 %v143
    %v156 = vpack.c.b16 %v153, %v152
    %v157 = vpack.c.b16 %v155, %v154
    %vm160 = vcmask 261120
    %v162 = vsel %vm160, %v139, 0
    %164 = vmatpush.bf16.msra.mxu0 0
    %165 = vmatpush.bf16.msra.mxu0 0
    %166 = vmatpush.bf16.msra.mxu0 0
    %167 = vmatpush.bf16.msra.mxu0 0
    %168 = vmatpush.bf16.msra.mxu0 0
    %169 = vmatpush.bf16.msra.mxu0 0
    %170 = vmatpush.bf16.msra.mxu0 %v157
    %171 = vmatpush.bf16.msra.mxu0 %v156
    %172 = vmatmul.bf16.gmra.mxu0 %v162
    %v173 = vpop.f32.mrf.mxu0
    %v174 = vadd.f32 %v146, %v173
    %v175 = vpop.f32.mrf.mxu0
    %v176 = vadd.f32 %v146, %v175
    %177 = vdwg.mxu0
    %v179 = vrot.slane %v136, 1
    %v180 = vperm.slane %v136, 0
    %v181 = vperm.slane %v179, 0
    %v184 = vadd.f32 %v174, %v180
    %v185 = vadd.f32 %v176, %v181
    %v186 = vmul.f32 %v184, %v184
    %v187 = vmul.f32 %v185, %v185
    %v188 = vmul.f32 %v184, %v186
    %v189 = vmul.f32 %v185, %v187
    %v190 = vmul.f32 %v188, 0.044715
    %v191 = vmul.f32 %v189, 0.044715
    %v192 = vadd.f32 %v184, %v190
    %v193 = vadd.f32 %v185, %v191
    %v194 = vmul.f32 %v192, 0.7978846
    %v195 = vmul.f32 %v193, 0.7978846
    %v196 = vtanh.pop %v194
    %v197 = vtanh.pop %v195
    %v198 = vadd.f32 %v196, 1.0
    %v199 = vadd.f32 %v197, 1.0
    %v200 = vmul.f32 %v198, 0.5
    %v201 = vmul.f32 %v199, 0.5
    %v202 = vmul.f32 %v184, %v200
    %v203 = vmul.f32 %v185, %v201
    %v204 = vpack.c.bf16 %v203, %v202
    %v205 = vld [vmem:[%s10] sm:$0xf]
    %v206 = vld [vmem:[%s10 + $0x4] sm:$0xf]
    %v207 = vld [vmem:[%s10 + $0x8] sm:$0xf]
    %v208 = vld [vmem:[%s10 + $0xc] sm:$0xf]
    %v209 = vld [vmem:[%s10 + $0x10] sm:$0xf]
    %v210 = vld [vmem:[%s10 + $0x14] sm:$0xf]
    %v211 = vld [vmem:[%s10 + $0x18] sm:$0xf]
    %v212 = vld [vmem:[%s10 + $0x1c] sm:$0xf]
    %v213 = vld [vmem:[%s10 + $0x20] sm:$0xf]
    %v214 = vld [vmem:[%s10 + $0x24] sm:$0xf]
    %v215 = vld [vmem:[%s10 + $0x28] sm:$0xf]
    %v216 = vld [vmem:[%s10 + $0x2c] sm:$0xf]
    %v217 = vld [vmem:[%s10 + $0x30] sm:$0xf]
    %v218 = vld [vmem:[%s10 + $0x34] sm:$0xf]
    %v219 = vld [vmem:[%s10 + $0x38] sm:$0xf]
    %v220 = vld [vmem:[%s10 + $0x3c] sm:$0xf]
    %v221 = vld [vmem:[%s11] sm:$0x1]
    %v223 = vperm.slane %v221, 0
    %v241 = vunpack.c.l.b16 %v205
    %v242 = vunpack.c.l.b16 %v206
    %v243 = vunpack.c.l.b16 %v207
    %v244 = vunpack.c.l.b16 %v208
    %v245 = vunpack.c.l.b16 %v209
    %v246 = vunpack.c.l.b16 %v210
    %v247 = vunpack.c.l.b16 %v211
    %v248 = vunpack.c.l.b16 %v212
    %v249 = vunpack.c.l.b16 %v213
    %v250 = vunpack.c.l.b16 %v214
    %v251 = vunpack.c.l.b16 %v215
    %v252 = vunpack.c.l.b16 %v216
    %v253 = vunpack.c.l.b16 %v217
    %v254 = vunpack.c.l.b16 %v218
    %v255 = vunpack.c.l.b16 %v219
    %v256 = vunpack.c.l.b16 %v220
    %v257 = vpack.c.b16 %v242, %v241
    %v258 = vpack.c.b16 %v244, %v243
    %v259 = vpack.c.b16 %v246, %v245
    %v260 = vpack.c.b16 %v248, %v247
    %v261 = vpack.c.b16 %v250, %v249
    %v262 = vpack.c.b16 %v252, %v251
    %v263 = vpack.c.b16 %v254, %v253
    %v264 = vpack.c.b16 %v256, %v255
    %273 = vmatpush.bf16.msra.mxu0 %v264
    %274 = vmatpush.bf16.msra.mxu0 %v263
    %275 = vmatpush.bf16.msra.mxu0 %v262
    %276 = vmatpush.bf16.msra.mxu0 %v261
    %277 = vmatpush.bf16.msra.mxu0 %v260
    %278 = vmatpush.bf16.msra.mxu0 %v259
    %279 = vmatpush.bf16.msra.mxu0 %v258
    %280 = vmatpush.bf16.msra.mxu0 %v257
    %281 = vmatmul.bf16.gmra.mxu0 %v204
    %v282 = vpop.f32.mrf.mxu0
    %v283 = vadd.f32 %v223, %v282
    %v284 = vpop.f32.mrf.mxu0
    %v285 = vadd.f32 %v223, %v284
    %286 = vdwg.mxu0
    %287 = vst.msk [vmem:[#allocation7] sm:$0xff] %vm160, %v283
    %288 = vst.msk [vmem:[#allocation7 + $0x8] sm:$0xff] %vm160, %v285
    // Predicated region
    $region50: #{_denoiser_apply.1} parent=1 // pred_check
      _
    $region51: #{_denoiser_apply.1} parent=1 // pred_check_branch
      %290 = sbr.rel (0) target = $region53
    $region52: #{_denoiser_apply.1} parent=1 // pred_region
      %292 = vsyncadd [#allocation6], 0
      %s293 = sshll.u32 [#allocation7], 4
      %s294 = int_to_ptr.vmem [resolvable:$true] %s293
      %s295 = sshll.u32 %s12, 4
      %s296 = int_to_ptr.hbm [resolvable:$true] %s295
      %301 = dma.vmem_to_hbm [thread:$0]  %s294, 256, %s296, [#allocation6], 128, 128, 8
    $region53: #{_denoiser_apply.1} parent=1 // pred_fallthru
      _
    // Predicated region
    $region54: #{_denoiser_apply.1} parent=1 // pred_check
      _
    $region55: #{_denoiser_apply.1} parent=1 // pred_check_branch
      %303 = sbr.rel (0) target = $region57
    $region56: #{_denoiser_apply.1} parent=1 // pred_region
      %305 = dma.done [#allocation6], 256
    $region57: #{_denoiser_apply.1} parent=1 // pred_fallthru
      _
    %306 = vsyncpa [#allocation5], 1
    %307 = vsyncpa [#allocation6], 1

</llo_original>
